<compile_context>
chip_gen: v5e
topology: v5e:2x2
jax: 0.10.0
libtpu: 0.0.40
codegen_flags: <defaults>
</compile_context>

<pallas_src>
import functools

import jax
import jax.numpy as jnp
from jax import lax
from jax.experimental import pallas as pl
from jax.experimental.pallas import tpu as pltpu


def _round_up(x, m):
    return ((x + m - 1) // m) * m


def _num_tensorcores():
    """2 on chips with two TensorCores (v7x, v4/v5p megacore), else 1."""
    try:
        kind = jax.devices()[0].device_kind.lower()
    except Exception:
        return 1
    return 2 if any(tag in kind for tag in ("v7", "7x", "v4", "v5p")) else 1


def _vmem_capacity_bytes():
    try:
        v = int(pltpu.get_tpu_info().vmem_capacity_bytes)
        if v > 0:
            return v
    except Exception:
        pass
    return 64 * 1024 * 1024   # conservative default = v7x per-TC VMEM


def _largest_row_block(rows, sub, cap):
    """Largest multiple-of-`sub` divisor of `rows` (rows % sub == 0) that is <= cap."""
    m = rows // sub
    cap_q = max(1, cap // sub)
    best = 1
    d = 1
    while d * d <= m:
        if m % d == 0:
            for q in (d, m // d):
                if q <= cap_q and q > best:
                    best = q
        d += 1
    return best * sub


def _weighted_mse_kernel(p_ref, t_ref, out_ref,
                         tot_ref, zer_ref, cnt_ref, acc_ref,
                         *, hw, lane_tile, lane_tail):
    si = pl.program_id(1)            # row-block step (reduction)
    li = pl.program_id(2)            # lane-chunk step (reduction, usually 1)
    n_si = pl.num_programs(1)
    n_li = pl.num_programs(2)

    @pl.when(jnp.logical_and(si == 0, li == 0))
    def _():
        acc_ref[...] = jnp.zeros_like(acc_ref)

    @pl.when(li == 0)
    def _():
        tot_ref[...] = jnp.zeros_like(tot_ref)
        zer_ref[...] = jnp.zeros_like(zer_ref)
        cnt_ref[...] = jnp.zeros_like(cnt_ref)

    p = p_ref[...].astype(jnp.float32)           # (tb, lane_tile)
    t = t_ref[...].astype(jnp.float32)
    d = p - t
    sq = d * d                                   # elementwise MSE (reduction='none')
    is_zero = (t == 0.0)

    if lane_tail:
        # Only reached when lane tiling is active AND hw % lane_tile != 0:
        # mask the undefined tail lanes of the last chunk (NaN-safe where).
        col = li * lane_tile + lax.broadcasted_iota(jnp.int32, t.shape, 1)
        valid = col < hw
        sq = jnp.where(valid, sq, 0.0)
        is_zero = jnp.logical_and(is_zero, valid)

    tot_ref[...] += jnp.sum(sq, axis=-1, keepdims=True)                         # (tb,1)
    zer_ref[...] += jnp.sum(jnp.where(is_zero, sq, 0.0), axis=-1, keepdims=True)
    cnt_ref[...] += jnp.sum(is_zero.astype(jnp.float32), axis=-1, keepdims=True)

    @pl.when(li == n_li - 1)
    def _():
        # pos_ratio*(S_tot - S_zero) + neg_ratio*S_zero == pos*S_tot + (1-2*pos)*S_zero
        pos = cnt_ref[...] * jnp.float32(1.0 / hw)
        acc_ref[...] += pos * tot_ref[...] + (1.0 - 2.0 * pos) * zer_ref[...]

    @pl.when(jnp.logical_and(si == n_si - 1, li == n_li - 1))
    def _():
        out_ref[0, 0] = jnp.sum(acc_ref[...])


def _plain_mse_kernel(p_ref, t_ref, out_ref, acc_ref, *, hw, lane_tile, lane_tail):
    si = pl.program_id(1)
    li = pl.program_id(2)

    @pl.when(jnp.logical_and(si == 0, li == 0))
    def _():
        acc_ref[...] = jnp.zeros_like(acc_ref)

    p = p_ref[...].astype(jnp.float32)
    t = t_ref[...].astype(jnp.float32)
    d = p - t
    sq = d * d
    if lane_tail:
        col = li * lane_tile + lax.broadcasted_iota(jnp.int32, t.shape, 1)
        sq = jnp.where(col < hw, sq, 0.0)
    acc_ref[...] += jnp.sum(sq, axis=-1, keepdims=True)

    @pl.when(jnp.logical_and(si == pl.num_programs(1) - 1,
                             li == pl.num_programs(2) - 1))
    def _():
        out_ref[0, 0] = jnp.sum(acc_ref[...])


def mse_loss(preds, targets, weighted=True, *, _lane_tile_override=None):
    """Pallas implementation of losses/loss.py::MSELoss.forward.

    preds, targets: (N, C, H, W) arrays. Returns a scalar float32.
    """
    assert preds.shape == targets.shape
    n, c, h, w = targets.shape
    bc = n * c
    hw = h * w
    total = bc * hw
    itemsize = jnp.dtype(targets.dtype).itemsize
    sub = max(8, 32 // itemsize)        # sublane pack: 8 (f32), 16 (bf16), 32 (i8)

    n_cores = _num_tensorcores()
    vmem_cap = _vmem_capacity_bytes()
    tile_budget = vmem_cap // 8         # per input, per pipeline buffer

    # Lane-dense 2-D view: one plane per row, flattened spatial on the lane axis.
    p2 = preds.reshape(bc, hw)
    t2 = targets.reshape(bc, hw)

    # Rows: pad with zeros ONLY when bc is not sublane-aligned (zero rows
    # contribute exactly 0 to every partial sum and to the zero count).
    if bc % sub != 0:
        # A pad pass is happening anyway; round so a clean 2-core split exists.
        bc_r = _round_up(bc, sub * (2 if n_cores >= 2 else 1))
        p2 = jnp.pad(p2, ((0, bc_r - bc), (0, 0)))
        t2 = jnp.pad(t2, ((0, bc_r - bc), (0, 0)))
    else:
        bc_r = bc

    # Lanes: keep the full row (no padding, no mask) unless the plane is huge,
    # in which case chunk lanes in 128-multiples to cap the VMEM working set.
    if _lane_tile_override is not None:
        tl = min(_lane_tile_override, hw)
    elif sub * hw * itemsize <= tile_budget:
        tl = hw
    else:
        tl = max(128, (tile_budget // (sub * itemsize)) // 128 * 128)
    steps_l = -(-hw // tl)
    lane_tail = (tl != hw) and (hw % tl != 0)

    # Row blocks / core split: exact cover of bc_r, never pad to fit the grid.
    p_axis = 2 if (n_cores >= 2 and bc_r % (2 * sub) == 0) else 1
    rows_per_core = bc_r // p_axis
    tb_cap = max(sub, (tile_budget // (tl * itemsize)) // sub * sub)
    tb = _largest_row_block(rows_per_core, sub, tb_cap)
    steps_r = rows_per_core // tb
    assert p_axis * steps_r * tb == bc_r

    if weighted:
        kernel = functools.partial(_weighted_mse_kernel,
                                   hw=hw, lane_tile=tl, lane_tail=lane_tail)
        scratch = [pltpu.VMEM((tb, 1), jnp.float32) for _ in range(4)]
        flops = 8 * total
    else:
        kernel = functools.partial(_plain_mse_kernel,
                                   hw=hw, lane_tile=tl, lane_tail=lane_tail)
        scratch = [pltpu.VMEM((tb, 1), jnp.float32)]
        flops = 3 * total

    in_map = lambda pi, si, li: (pi * steps_r + si, li)      # noqa: E731

    partials = pl.pallas_call(
        kernel,
        out_shape=jax.ShapeDtypeStruct((p_axis, 1), jnp.float32),
        grid_spec=pltpu.PrefetchScalarGridSpec(
            num_scalar_prefetch=0,
            grid=(p_axis, steps_r, steps_l),
            in_specs=[
                pl.BlockSpec((tb, tl), in_map),
                pl.BlockSpec((tb, tl), in_map),
            ],
            out_specs=pl.BlockSpec((1, 1), lambda pi, si, li: (pi, 0),
                                   memory_space=pltpu.SMEM),
            scratch_shapes=scratch,
        ),
        compiler_params=pltpu.CompilerParams(
            dimension_semantics=("parallel", "arbitrary", "arbitrary"),
            vmem_limit_bytes=(40 * 2**20 if vmem_cap <= 64 * 2**20 else 72 * 2**20),
        ),
        cost_estimate=pl.CostEstimate(
            flops=flops,
            transcendentals=0,
            bytes_accessed=2 * total * itemsize + 4 * p_axis,
        ),
    )(p2, t2)

    return jnp.sum(partials) / jnp.float32(total)


def _reference_mse_loss(preds, targets, weighted=True):
    # Pure-JAX mirror of the PyTorch module, for verification.
    loss = (preds - targets) ** 2
    if not weighted:
        return jnp.mean(loss)
    n, c, h, w = targets.shape
    num_elements = h * w
    mask = (targets == 0.0).astype(jnp.float32)
    pos_ratios = mask.sum(axis=(2, 3)) / num_elements
    neg_ratios = 1.0 - pos_ratios
    weights = jnp.where(
        targets != 0.0,
        pos_ratios.reshape(n, c, 1, 1),
        neg_ratios.reshape(n, c, 1, 1),
    )
    return jnp.mean(weights * loss)


if __name__ == "__main__":
    key = jax.random.PRNGKey(0)
    k1, k2, k3 = jax.random.split(key, 3)

    # Shape implied by the module: NCHW with square spatial planes.
    N, C, H, W = 2, 4, 16, 16
    preds = jax.random.normal(k1, (N, C, H, W), dtype=jnp.float32)
    targets = jax.random.normal(k2, (N, C, H, W), dtype=jnp.float32)
    zero_mask = jax.random.bernoulli(k3, p=0.4, shape=(N, C, H, W))
    targets = jnp.where(zero_mask, 0.0, targets)

    out = jax.block_until_ready(mse_loss(preds, targets, weighted=True))
    ref = _reference_mse_loss(preds, targets, weighted=True)
    assert jnp.allclose(out, ref, rtol=1e-5, atol=1e-6), (out, ref)

    # Unweighted ('mean') path.
    out_u = jax.block_until_ready(mse_loss(preds, targets, weighted=False))
    ref_u = _reference_mse_loss(preds, targets, weighted=False)
    assert jnp.allclose(out_u, ref_u, rtol=1e-5, atol=1e-6), (out_u, ref_u)

    # Non-aligned rows, non-128 lanes (no lane padding needed anymore).
    N2, C2, H2, W2 = 3, 7, 12, 12
    p_b = jax.random.normal(k1, (N2, C2, H2, W2), dtype=jnp.float32)
    t_b = jax.random.normal(k2, (N2, C2, H2, W2), dtype=jnp.float32)
    zm_b = jax.random.bernoulli(k3, p=0.3, shape=(N2, C2, H2, W2))
    t_b = jnp.where(zm_b, 0.0, t_b)
    out_b = jax.block_until_ready(mse_loss(p_b, t_b, weighted=True))
    ref_b = _reference_mse_loss(p_b, t_b, weighted=True)
    assert jnp.allclose(out_b, ref_b, rtol=1e-5, atol=1e-6), (out_b, ref_b)

    # Exercise the lane-tiled path (clean 128-multiple chunks) at small shapes.
    out_c = jax.block_until_ready(
        mse_loss(preds, targets, weighted=True, _lane_tile_override=128))
    assert jnp.allclose(out_c, ref, rtol=1e-5, atol=1e-6), (out_c, ref)

    # Exercise the lane-tiled path with a masked partial tail chunk.
    out_d = jax.block_until_ready(
        mse_loss(p_b, t_b, weighted=True, _lane_tile_override=128))
    assert jnp.allclose(out_d, ref_b, rtol=1e-5, atol=1e-6), (out_d, ref_b)

    print("KERNEL_OK")
</pallas_src>

<mosaic_0001>
module attributes {stable_mosaic.version = 11 : i64} {
  func.func @_weighted_mse_kernel(%arg0: i32, %arg1: i32, %arg2: i32, %arg3: memref<8x256xf32, #tpu.memory_space<vmem>>, %arg4: memref<8x256xf32, #tpu.memory_space<vmem>>, %arg5: memref<1x1xf32, #tpu.memory_space<smem>>, %arg6: memref<8x1xf32, #tpu.memory_space<vmem>>, %arg7: memref<8x1xf32, #tpu.memory_space<vmem>>, %arg8: memref<8x1xf32, #tpu.memory_space<vmem>>, %arg9: memref<8x1xf32, #tpu.memory_space<vmem>>) attributes {dimension_semantics = [#tpu.dimension_semantics<parallel>, #tpu.dimension_semantics<arbitrary>, #tpu.dimension_semantics<arbitrary>], iteration_bounds = array<i64: 1, 1, 1>, scalar_prefetch = 0 : i64, scratch_operands = 4 : i64, tpu.core_type = #tpu.core_type<tc>, window_params = [{transform_indices = @transform_0, window_bounds = array<i64: 8, 256>}, {transform_indices = @transform_1, window_bounds = array<i64: 8, 256>}, {transform_indices = @transform_2, window_bounds = array<i64: 1, 1>}]} {
    %c0_i32 = arith.constant 0 : i32
    %0 = arith.cmpi eq, %arg1, %c0_i32 : i32
    %c0_i32_0 = arith.constant 0 : i32
    %1 = arith.cmpi eq, %arg2, %c0_i32_0 : i32
    %2 = arith.andi %0, %1 : i1
    %3 = arith.extui %2 : i1 to i32
    %c0_i32_1 = arith.constant 0 : i32
    %4 = arith.cmpi ne, %3, %c0_i32_1 : i32
    scf.if %4 {
      %cst_28 = arith.constant 0.000000e+00 : f32
      %41 = vector.broadcast %cst_28 : f32 to vector<8x1xf32>
      %c0_29 = arith.constant 0 : index
      %c0_30 = arith.constant 0 : index
      %42 = vector.load %arg9[%c0_29, %c0_30] : memref<8x1xf32, #tpu.memory_space<vmem>>, vector<8x1xf32>
      tpu.vector_store %arg9[%c0_29, %c0_30], %41 {strides = array<i32>} : memref<8x1xf32, #tpu.memory_space<vmem>>, vector<8x1xf32>,
    } else {
    }
    %c0_i32_2 = arith.constant 0 : i32
    %5 = arith.cmpi eq, %arg2, %c0_i32_2 : i32
    %6 = arith.extui %5 : i1 to i32
    %c0_i32_3 = arith.constant 0 : i32
    %7 = arith.cmpi ne, %6, %c0_i32_3 : i32
    scf.if %7 {
      %cst_28 = arith.constant 0.000000e+00 : f32
      %41 = vector.broadcast %cst_28 : f32 to vector<8x1xf32>
      %c0_29 = arith.constant 0 : index
      %c0_30 = arith.constant 0 : index
      %42 = vector.load %arg6[%c0_29, %c0_30] : memref<8x1xf32, #tpu.memory_space<vmem>>, vector<8x1xf32>
      tpu.vector_store %arg6[%c0_29, %c0_30], %41 {strides = array<i32>} : memref<8x1xf32, #tpu.memory_space<vmem>>, vector<8x1xf32>,
      %cst_31 = arith.constant 0.000000e+00 : f32
      %43 = vector.broadcast %cst_31 : f32 to vector<8x1xf32>
      %c0_32 = arith.constant 0 : index
      %c0_33 = arith.constant 0 : index
      %44 = vector.load %arg7[%c0_32, %c0_33] : memref<8x1xf32, #tpu.memory_space<vmem>>, vector<8x1xf32>
      tpu.vector_store %arg7[%c0_32, %c0_33], %43 {strides = array<i32>} : memref<8x1xf32, #tpu.memory_space<vmem>>, vector<8x1xf32>,
      %cst_34 = arith.constant 0.000000e+00 : f32
      %45 = vector.broadcast %cst_34 : f32 to vector<8x1xf32>
      %c0_35 = arith.constant 0 : index
      %c0_36 = arith.constant 0 : index
      %46 = vector.load %arg8[%c0_35, %c0_36] : memref<8x1xf32, #tpu.memory_space<vmem>>, vector<8x1xf32>
      tpu.vector_store %arg8[%c0_35, %c0_36], %45 {strides = array<i32>} : memref<8x1xf32, #tpu.memory_space<vmem>>, vector<8x1xf32>,
    } else {
    }
    %c0 = arith.constant 0 : index
    %c0_4 = arith.constant 0 : index
    %8 = vector.load %arg3[%c0, %c0_4] : memref<8x256xf32, #tpu.memory_space<vmem>>, vector<8x256xf32>
    %c0_5 = arith.constant 0 : index
    %c0_6 = arith.constant 0 : index
    %9 = vector.load %arg4[%c0_5, %c0_6] : memref<8x256xf32, #tpu.memory_space<vmem>>, vector<8x256xf32>
    %10 = arith.subf %8, %9 : vector<8x256xf32>
    %11 = arith.mulf %10, %10 : vector<8x256xf32>
    %cst = arith.constant 0.000000e+00 : f32
    %12 = vector.broadcast %cst : f32 to vector<8x256xf32>
    %13 = arith.cmpf oeq, %9, %12 : vector<8x256xf32>
    %c0_7 = arith.constant 0 : index
    %c0_8 = arith.constant 0 : index
    %14 = vector.load %arg6[%c0_7, %c0_8] : memref<8x1xf32, #tpu.memory_space<vmem>>, vector<8x1xf32>
    %cst_9 = arith.constant dense<0.000000e+00> : vector<8xf32>
    %15 = vector.multi_reduction <add>, %11, %cst_9 [1] : vector<8x256xf32> to vector<8xf32>
    %16 = vector.shape_cast %15 : vector<8xf32> to vector<8x1xf32>
    %17 = arith.addf %14, %16 : vector<8x1xf32>
    %c0_10 = arith.constant 0 : index
    %c0_11 = arith.constant 0 : index
    %18 = vector.load %arg6[%c0_10, %c0_11] : memref<8x1xf32, #tpu.memory_space<vmem>>, vector<8x1xf32>
    tpu.vector_store %arg6[%c0_10, %c0_11], %17 {strides = array<i32>} : memref<8x1xf32, #tpu.memory_space<vmem>>, vector<8x1xf32>,
    %c0_12 = arith.constant 0 : index
    %c0_13 = arith.constant 0 : index
    %19 = vector.load %arg7[%c0_12, %c0_13] : memref<8x1xf32, #tpu.memory_space<vmem>>, vector<8x1xf32>
    %cst_14 = arith.constant 0.000000e+00 : f32
    %20 = vector.broadcast %cst_14 : f32 to vector<8x256xf32>
    %21 = arith.select %13, %11, %20 : vector<8x256xi1>, vector<8x256xf32>
    %cst_15 = arith.constant dense<0.000000e+00> : vector<8xf32>
    %22 = vector.multi_reduction <add>, %21, %cst_15 [1] : vector<8x256xf32> to vector<8xf32>
    %23 = vector.shape_cast %22 : vector<8xf32> to vector<8x1xf32>
    %24 = arith.addf %19, %23 : vector<8x1xf32>
    %c0_16 = arith.constant 0 : index
    %c0_17 = arith.constant 0 : index
    %25 = vector.load %arg7[%c0_16, %c0_17] : memref<8x1xf32, #tpu.memory_space<vmem>>, vector<8x1xf32>
    tpu.vector_store %arg7[%c0_16, %c0_17], %24 {strides = array<i32>} : memref<8x1xf32, #tpu.memory_space<vmem>>, vector<8x1xf32>,
    %c0_18 = arith.constant 0 : index
    %c0_19 = arith.constant 0 : index
    %26 = vector.load %arg8[%c0_18, %c0_19] : memref<8x1xf32, #tpu.memory_space<vmem>>, vector<8x1xf32>
    %27 = arith.extui %13 : vector<8x256xi1> to vector<8x256xi32>
    %28 = arith.sitofp %27 : vector<8x256xi32> to vector<8x256xf32>
    %cst_20 = arith.constant dense<0.000000e+00> : vector<8xf32>
    %29 = vector.multi_reduction <add>, %28, %cst_20 [1] : vector<8x256xf32> to vector<8xf32>
    %30 = vector.shape_cast %29 : vector<8xf32> to vector<8x1xf32>
    %31 = arith.addf %26, %30 : vector<8x1xf32>
    %c0_21 = arith.constant 0 : index
    %c0_22 = arith.constant 0 : index
    %32 = vector.load %arg8[%c0_21, %c0_22] : memref<8x1xf32, #tpu.memory_space<vmem>>, vector<8x1xf32>
    tpu.vector_store %arg8[%c0_21, %c0_22], %31 {strides = array<i32>} : memref<8x1xf32, #tpu.memory_space<vmem>>, vector<8x1xf32>,
    %c0_i32_23 = arith.constant 0 : i32
    %33 = arith.cmpi eq, %arg2, %c0_i32_23 : i32
    %34 = arith.extui %33 : i1 to i32
    %c0_i32_24 = arith.constant 0 : i32
    %35 = arith.cmpi ne, %34, %c0_i32_24 : i32
    scf.if %35 {
      %c0_28 = arith.constant 0 : index
      %c0_29 = arith.constant 0 : index
      %41 = vector.load %arg8[%c0_28, %c0_29] : memref<8x1xf32, #tpu.memory_space<vmem>>, vector<8x1xf32>
      %cst_30 = arith.constant 3.906250e-03 : f32
      %42 = vector.broadcast %cst_30 : f32 to vector<8x1xf32>
      %43 = arith.mulf %41, %42 : vector<8x1xf32>
      %c0_31 = arith.constant 0 : index
      %c0_32 = arith.constant 0 : index
      %44 = vector.load %arg9[%c0_31, %c0_32] : memref<8x1xf32, #tpu.memory_space<vmem>>, vector<8x1xf32>
      %c0_33 = arith.constant 0 : index
      %c0_34 = arith.constant 0 : index
      %45 = vector.load %arg6[%c0_33, %c0_34] : memref<8x1xf32, #tpu.memory_space<vmem>>, vector<8x1xf32>
      %46 = arith.mulf %43, %45 : vector<8x1xf32>
      %cst_35 = arith.constant 2.000000e+00 : f32
      %47 = vector.broadcast %cst_35 : f32 to vector<8x1xf32>
      %48 = arith.mulf %47, %43 : vector<8x1xf32>
      %cst_36 = arith.constant 1.000000e+00 : f32
      %49 = vector.broadcast %cst_36 : f32 to vector<8x1xf32>
      %50 = arith.subf %49, %48 : vector<8x1xf32>
      %c0_37 = arith.constant 0 : index
      %c0_38 = arith.constant 0 : index
      %51 = vector.load %arg7[%c0_37, %c0_38] : memref<8x1xf32, #tpu.memory_space<vmem>>, vector<8x1xf32>
      %52 = arith.mulf %50, %51 : vector<8x1xf32>
      %53 = arith.addf %46, %52 : vector<8x1xf32>
      %54 = arith.addf %44, %53 : vector<8x1xf32>
      %c0_39 = arith.constant 0 : index
      %c0_40 = arith.constant 0 : index
      %55 = vector.load %arg9[%c0_39, %c0_40] : memref<8x1xf32, #tpu.memory_space<vmem>>, vector<8x1xf32>
      tpu.vector_store %arg9[%c0_39, %c0_40], %54 {strides = array<i32>} : memref<8x1xf32, #tpu.memory_space<vmem>>, vector<8x1xf32>,
    } else {
    }
    %c0_i32_25 = arith.constant 0 : i32
    %36 = arith.cmpi eq, %arg1, %c0_i32_25 : i32
    %c0_i32_26 = arith.constant 0 : i32
    %37 = arith.cmpi eq, %arg2, %c0_i32_26 : i32
    %38 = arith.andi %36, %37 : i1
    %39 = arith.extui %38 : i1 to i32
    %c0_i32_27 = arith.constant 0 : i32
    %40 = arith.cmpi ne, %39, %c0_i32_27 : i32
    scf.if %40 {
      %c0_28 = arith.constant 0 : index
      %c0_29 = arith.constant 0 : index
      %41 = vector.load %arg9[%c0_28, %c0_29] : memref<8x1xf32, #tpu.memory_space<vmem>>, vector<8x1xf32>
      %42 = vector.shape_cast %41 : vector<8x1xf32> to vector<1x8x1xf32>
      %cst_30 = arith.constant dense<0.000000e+00> : vector<1xf32>
      %43 = vector.multi_reduction <add>, %42, %cst_30 [1, 2] : vector<1x8x1xf32> to vector<1xf32>
      %44 = vector.shape_cast %43 : vector<1xf32> to vector<1x1x1xf32>
      %45 = vector.extract %44[0, 0, 0] : f32 from vector<1x1x1xf32>
      %c0_31 = arith.constant 0 : index
      %c0_32 = arith.constant 0 : index
      %46 = memref.load %arg5[%c0_31, %c0_32] : memref<1x1xf32, #tpu.memory_space<smem>>
      memref.store %45, %arg5[%c0_31, %c0_32] : memref<1x1xf32, #tpu.memory_space<smem>>
    } else {
    }
    return
  }
  func.func @transform_0(%arg0: i32, %arg1: i32, %arg2: i32) -> (i32, i32) {
    %c1_i32 = arith.constant 1 : i32
    %0 = arith.muli %arg0, %c1_i32 : i32
    %1 = arith.addi %0, %arg1 : i32
    %c0_i32 = arith.constant 0 : i32
    return %1, %arg2 : i32, i32
  }
  func.func @transform_1(%arg0: i32, %arg1: i32, %arg2: i32) -> (i32, i32) {
    %c1_i32 = arith.constant 1 : i32
    %0 = arith.muli %arg0, %c1_i32 : i32
    %1 = arith.addi %0, %arg1 : i32
    %c0_i32 = arith.constant 0 : i32
    return %1, %arg2 : i32, i32
  }
  func.func @transform_2(%arg0: i32, %arg1: i32, %arg2: i32) -> (i32, i32) {
    %c0_i32 = arith.constant 0 : i32
    %c0_i32_0 = arith.constant 0 : i32
    return %arg0, %c0_i32 : i32, i32
  }
}

</mosaic_0001>

<llo_original>
// kernel: tpu_custom_call.1
$region0: #{tpu_custom_call.1}
  #allocation0 [shape = 'u32[]', space=smem, size = 0x4, offset = 0x4, fixed_abs, tag = 'smem constant byte address 0x4 - core index']
  #allocation1 [shape = 'u32[72,128]{1,0:T(1,128)}', space=vmem, size = 0x9000, scoped, tag = 'internal scratch']
  #allocation2 [shape = 'f32[8,1]{1,0:T(8,128)}', space=vmem, size = 0x1000, scoped, tag = 'scratch operand']
  #allocation3 [shape = 'f32[8,1]{1,0:T(8,128)}', space=vmem, size = 0x1000, scoped, tag = 'scratch operand']
  #allocation4 [shape = 'f32[8,1]{1,0:T(8,128)}', space=vmem, size = 0x1000, scoped, tag = 'scratch operand']
  #allocation5 [shape = 'f32[8,1]{1,0:T(8,128)}', space=vmem, size = 0x1000, scoped, tag = 'scratch operand']
  %s0 = inlined_call_operand.hbm [shape: f32[8,256], index: 0, kind: input, shape index: {}]
  %s1 = inlined_call_operand.hbm [shape: f32[8,256], index: 1, kind: input, shape index: {}]
  %s2 = inlined_call_operand.hbm [shape: f32[1,1], index: 2, kind: output, shape index: {}]
  %s3 = sld [smem:[#allocation0]]
  $region42: #{tpu_custom_call.1} parent=0
    _
  %s5 = ssub.s32 1, %s3
  %s6 = scalar_select 0, %s5, %s3
  $region1: #{tpu_custom_call.1} parent=0
    #allocation6 [shape = 'u8[8192]{0}', space=vmem, size = 0x2000, scoped, tag = 'input window, operand 0, single buffered']
    #allocation7 [shape = 's32[1]{0}', space=sflag, size = 0x4, scoped, tag = 'scoped memory for tpu_custom_call.1']
    #allocation8 [shape = 's32[1]{0}', space=sflag, size = 0x4, scoped, tag = 'scoped memory for tpu_custom_call.1']
    #allocation9 [shape = 'u8[8192]{0}', space=vmem, size = 0x2000, scoped, tag = 'input window, operand 1, single buffered']
    #allocation10 [shape = 's32[1]{0}', space=sflag, size = 0x4, scoped, tag = 'scoped memory for tpu_custom_call.1']
    #allocation11 [shape = 'u8[512]{0}', space=smem, size = 0x200, scoped, tag = 'output window, operand 0, single buffered']
    %7 = vsyncpa [#allocation7], 0
    %8 = vsyncpa [#allocation10], 0
    %9 = vsyncpa [#allocation8], 0
    // Predicated region
    $region2: #{tpu_custom_call.1} parent=1 // pred_check
      _
    $region3: #{tpu_custom_call.1} parent=1 // pred_check_branch
      %11 = sbr.rel (0) target = $region5
    $region4: #{tpu_custom_call.1} parent=1 // pred_region
      %s12 = sadd.s32 0, 0
      %14 = vsyncadd [#allocation7], 0
      %s15 = smul.addr %s12, 2
      %s16 = smul.addr %s15, 8
      %s17 = scalar_lea.hbm %s0, %s16
      %s19 = sshll.u32 %s17, 4
      %s20 = int_to_ptr.hbm [resolvable:$true] %s19
      %s21 = sshll.u32 [#allocation6], 4
      %s22 = int_to_ptr.vmem [resolvable:$true] %s21
      %24 = dma.hbm_to_vmem [thread:$0]  %s20, 256, %s22, [#allocation7]
    $region5: #{tpu_custom_call.1} parent=1 // pred_fallthru
      _
    // Predicated region
    $region6: #{tpu_custom_call.1} parent=1 // pred_check
      _
    $region7: #{tpu_custom_call.1} parent=1 // pred_check_branch
      %26 = sbr.rel (0) target = $region9
    $region8: #{tpu_custom_call.1} parent=1 // pred_region
      %s27 = sadd.s32 0, 0
      %29 = vsyncadd [#allocation10], 0
      %s30 = smul.addr %s27, 2
      %s31 = smul.addr %s30, 8
      %s32 = scalar_lea.hbm %s1, %s31
      %s34 = sshll.u32 %s32, 4
      %s35 = int_to_ptr.hbm [resolvable:$true] %s34
      %s36 = sshll.u32 [#allocation9], 4
      %s37 = int_to_ptr.vmem [resolvable:$true] %s36
      %39 = dma.hbm_to_vmem [thread:$0]  %s35, 256, %s37, [#allocation10]
    $region9: #{tpu_custom_call.1} parent=1 // pred_fallthru
      _
    // Predicated region
    $region10: #{tpu_custom_call.1} parent=1 // pred_check
      _
    $region11: #{tpu_custom_call.1} parent=1 // pred_check_branch
      %41 = sbr.rel (0) target = $region13
    $region12: #{tpu_custom_call.1} parent=1 // pred_region
      %43 = dma.done [#allocation7], 256
    $region13: #{tpu_custom_call.1} parent=1 // pred_fallthru
      _
    // Predicated region
    $region14: #{tpu_custom_call.1} parent=1 // pred_check
      _
    $region15: #{tpu_custom_call.1} parent=1 // pred_check_branch
      %45 = sbr.rel (0) target = $region17
    $region16: #{tpu_custom_call.1} parent=1 // pred_region
      %47 = dma.done [#allocation10], 256
    $region17: #{tpu_custom_call.1} parent=1 // pred_fallthru
      _
    %s48 = sadd.s32 0, 0
    %s49 = sadd.s32 0, 0
    %p50 = scmp.eq.s32.totalorder 0, 0
    %p51 = scmp.eq.s32.totalorder 0, 0
    %p52 = pnand %p50, %p51
    %p53 = pneg %p52
    // Predicated region
    $region18: #{tpu_custom_call.1} parent=1 // pred_check
      _
    $region19: #{tpu_custom_call.1} parent=1 // pred_check_branch
      %55 = sbr.rel (%p52) target = $region21
    $region20: #{tpu_custom_call.1} parent=1 // pred_region
      %vm56 = vcmask 7168
      %57 = vst.msk [vmem:[#allocation5] sm:$0xff] %vm56, 0.0
    $region21: #{tpu_custom_call.1} parent=1 // pred_fallthru
      _
    // Predicated region
    $region22: #{tpu_custom_call.1} parent=1 // pred_check
      %p58 = pneg %p51
    $region23: #{tpu_custom_call.1} parent=1 // pred_check_branch
      %60 = sbr.rel (%p58) target = $region25
    $region24: #{tpu_custom_call.1} parent=1 // pred_region
      %vm61 = vcmask 7168
      %62 = vst.msk [vmem:[#allocation2] sm:$0xff] %vm61, 0.0
      %63 = vst.msk [vmem:[#allocation3] sm:$0xff] %vm61, 0.0
      %64 = vst.msk [vmem:[#allocation4] sm:$0xff] %vm61, 0.0
    $region25: #{tpu_custom_call.1} parent=1 // pred_fallthru
      _
    %v65 = vld [vmem:[#allocation6] sm:$0xff]
    %v66 = vld [vmem:[#allocation6 + $0x8] sm:$0xff]
    %v67 = vld [vmem:[#allocation9] sm:$0xff]
    %v68 = vld [vmem:[#allocation9 + $0x8] sm:$0xff]
    %v69 = vsub.f32 %v65, %v67
    %v70 = vsub.f32 %v66, %v68
    %v71 = vmul.f32 %v69, %v69
    %v72 = vmul.f32 %v70, %v70
    %vm73 = vcmp.eq.f32.partialorder %v67, 0.0
    %vm74 = vcmp.eq.f32.partialorder %v68, 0.0
    %v75 = vld [vmem:[#allocation2] sm:$0xff]
    %v76 = vadd.f32 %v71, %v72
    %77 = vadd.xlane.f32.xlu0 %v76
    %v78 = vpop.xlane.xlu0 %77
    %v79 = vadd.f32 %v75, %v78
    %vm80 = vcmask 7168
    %81 = vst.msk [vmem:[#allocation2] sm:$0xff] %vm80, %v79
    %v82 = vld [vmem:[#allocation3] sm:$0xff]
    %v83 = vsel %vm73, %v71, 0.0
    %v84 = vsel %vm74, %v72, 0.0
    %v85 = vadd.f32 %v83, %v84
    %86 = vadd.xlane.f32.xlu0 %v85
    %v87 = vpop.xlane.xlu0 %86
    %v88 = vadd.f32 %v82, %v87
    %89 = vst.msk [vmem:[#allocation3] sm:$0xff] %vm80, %v88
    %v90 = vld [vmem:[#allocation4] sm:$0xff]
    %v91 = vsel %vm73, 1, 0
    %v92 = vsel %vm74, 1, 0
    %v93 = vcvt.s32.f32 %v91
    %v94 = vcvt.s32.f32 %v92
    %v95 = vadd.f32 %v93, %v94
    %96 = vadd.xlane.f32.xlu0 %v95
    %v97 = vpop.xlane.xlu0 %96
    %v98 = vadd.f32 %v90, %v97
    %99 = vst.msk [vmem:[#allocation4] sm:$0xff] %vm80, %v98
    // Predicated region
    $region26: #{tpu_custom_call.1} parent=1 // pred_check
      %p100 = pneg %p51
    $region27: #{tpu_custom_call.1} parent=1 // pred_check_branch
      %102 = sbr.rel (%p100) target = $region29
    $region28: #{tpu_custom_call.1} parent=1 // pred_region
      %v103 = vld [vmem:[#allocation4] sm:$0xff]
      %v104 = vmul.f32 %v103, 0.00390625
      %v105 = vld [vmem:[#allocation5] sm:$0xff]
      %v106 = vld [vmem:[#allocation2] sm:$0xff]
      %v107 = vmul.f32 %v104, %v106
      %v108 = vmul.f32 %v104, 2.0
      %v109 = vsub.f32 1.0, %v108
      %v110 = vld [vmem:[#allocation3] sm:$0xff]
      %v111 = vmul.f32 %v109, %v110
      %v112 = vadd.f32 %v107, %v111
      %v113 = vadd.f32 %v105, %v112
      %114 = vst.msk [vmem:[#allocation5] sm:$0xff] %vm80, %v113
    $region29: #{tpu_custom_call.1} parent=1 // pred_fallthru
      _
    // Predicated region
    $region30: #{tpu_custom_call.1} parent=1 // pred_check
      _
    $region31: #{tpu_custom_call.1} parent=1 // pred_check_branch
      %116 = sbr.rel (%p52) target = $region33
    $region32: #{tpu_custom_call.1} parent=1 // pred_region
      %v117 = vld [vmem:[#allocation5] sm:$0xff]
      %v118 = vsel %vm80, %v117, 0.0
      %119 = vadd.xlane.f32.xlu0 %v118
      %v120 = vpop.xlane.xlu0 %119
      %v121 = vrot.slane %v120, 4
      %v122 = vadd.f32 %v120, %v121
      %v123 = vrot.slane %v122, 2
      %v124 = vadd.f32 %v122, %v123
      %v125 = vrot.slane %v124, 1
      %v126 = vadd.f32 %v124, %v125
      %s127 = vtos %v126
      %s128 = scalar_lea.smem [#allocation11], 0
      %129 = sst [smem:[%s128]] %s127
    $region33: #{tpu_custom_call.1} parent=1 // pred_fallthru
      _
    // Predicated region
    $region34: #{tpu_custom_call.1} parent=1 // pred_check
      _
    $region35: #{tpu_custom_call.1} parent=1 // pred_check_branch
      %131 = sbr.rel (0) target = $region37
    $region36: #{tpu_custom_call.1} parent=1 // pred_region
      %133 = vsyncadd [#allocation8], 0
      %s135 = sshll.u32 %s2, 4
      %s136 = int_to_ptr.hbm [resolvable:$true] %s135
      %138 = dma.smem_to_hbm [#allocation11], 16, %s136, [#allocation8]
    $region37: #{tpu_custom_call.1} parent=1 // pred_fallthru
      _
    // Predicated region
    $region38: #{tpu_custom_call.1} parent=1 // pred_check
      _
    $region39: #{tpu_custom_call.1} parent=1 // pred_check_branch
      %140 = sbr.rel (0) target = $region41
    $region40: #{tpu_custom_call.1} parent=1 // pred_region
      %142 = dma.done [#allocation8], 16
    $region41: #{tpu_custom_call.1} parent=1 // pred_fallthru
      _
    %143 = sfence
    %144 = vsyncpa [#allocation7], 1
    %145 = vsyncpa [#allocation10], 1
    %146 = vsyncpa [#allocation8], 1

</llo_original>
